<compile_context>
chip_gen: v6e
topology: v6e:2x2x1
jax: 0.10.0
libtpu: 0.0.40
codegen_flags: <defaults>
</compile_context>

<pallas_src>
import functools

import jax
import jax.numpy as jnp
from jax.experimental import pallas as pl
from jax.experimental.pallas import tpu as pltpu


def _round_up(x, m):
    return ((x + m - 1) // m) * m


# ---------------------------------------------------------------------------
# Kernel body
# ---------------------------------------------------------------------------
def _mlp_kernel(x_ref, w1_ref, b1_ref, w2_ref, b2_ref, o_ref, *, compute_dtype):
    """Fused matmul -> bias -> ReLU -> matmul -> bias on one (folded) row tile.

    x arrives in its original dtype (no wrapper-side cast pass over HBM) and is
    cast to the MXU compute dtype in-register here; biases, the ReLU, and both
    accumulators stay f32 (v5e has no bf16 VPU path).
    """
    x = x_ref[...].astype(compute_dtype)
    h = jnp.dot(x, w1_ref[...], preferred_element_type=jnp.float32)
    h = jnp.maximum(h + b1_ref[...], 0.0)                      # bias + ReLU in f32
    y = jnp.dot(h.astype(compute_dtype), w2_ref[...],
                preferred_element_type=jnp.float32)
    o_ref[...] = (y + b2_ref[...]).astype(o_ref.dtype)


# ---------------------------------------------------------------------------
# Sizing heuristics
# ---------------------------------------------------------------------------
_VMEM_LIMIT = 40 * 1024 * 1024        # requested scoped VMEM (safe on v5e/v6e/v7x)
_VMEM_BUDGET = 32 * 1024 * 1024       # target for the block_g shrink check
_X_TILE_TARGET_BYTES = 1 << 20        # ~1 MiB of x per grid step


def _tile_bytes(rows, cols, dtype):
    """VMEM bytes of a (rows, cols) tile including sublane/lane padding."""
    itemsize = jnp.dtype(dtype).itemsize
    sub = 8 * (4 // itemsize)                       # 8 f32 / 16 bf16 / 32 int8
    r = _round_up(max(int(rows), 1), sub)
    c = _round_up(max(int(cols), 1), 128)
    return r * c * itemsize


def _vmem_bytes(block_g, xcols, hid_f, out_f, x_dtype, c_dtype, o_dtype):
    # The BlockSpec pipeline double-buffers every input/output, including the
    # constant-index (resident) weight specs, so budget 2x of those; the f32
    # hidden intermediate lives once in vregs / VMEM spill.
    per_buf = (_tile_bytes(block_g, xcols, x_dtype)     # x tile
               + _tile_bytes(block_g, out_f, o_dtype)   # output tile
               + _tile_bytes(xcols, hid_f, c_dtype)     # W1 (block-diag)
               + _tile_bytes(1, hid_f, jnp.float32)     # b1
               + _tile_bytes(hid_f, out_f, c_dtype)     # W2 (block-diag)
               + _tile_bytes(1, out_f, jnp.float32))    # b2
    return 2 * per_buf + _tile_bytes(block_g, hid_f, jnp.float32)


def _pick_fold(in_dim, hid, out_dim, cbytes, max_weight_bytes=4 << 20):
    """Smallest fold factor F that makes both F*in and F*out lane-dense (128-
    multiples), subject to a cap on the block-diagonal weight footprint."""
    best = 1
    for f in (1, 2, 4, 8, 16):
        w_bytes = f * f * (in_dim * hid + hid * out_dim) * cbytes
        if w_bytes > max_weight_bytes:
            break
        if (in_dim * f) % 128 == 0 and (out_dim * f) % 128 == 0:
            return f
        if best == 1 and (out_dim * f) % 128 == 0:
            best = f                                   # at least densify the store
    return best


def _pick_block_g(B_fold, xcols, hid_f, out_f, x_dtype, c_dtype, o_dtype):
    # Round to the sublane packing of the narrowest dtype touched (bf16 -> 16).
    min_item = min(jnp.dtype(x_dtype).itemsize, jnp.dtype(c_dtype).itemsize)
    sub = 8 * (4 // min_item)
    # Size the tile from bytes-per-step (~1 MiB of x), not a fixed row count:
    # the ~0.35us per-grid-step overhead must stay small vs. DMA + compute.
    row_bytes = _round_up(xcols, 128) * jnp.dtype(x_dtype).itemsize
    bg = max(sub, (_X_TILE_TARGET_BYTES // row_bytes) // sub * sub)
    bg = min(bg, _round_up(B_fold, sub))
    # >= 2 grid steps whenever the batch permits (pipelining; both TCs on v7x).
    if B_fold > sub and pl.cdiv(B_fold, bg) < 2:
        bg = _round_up(pl.cdiv(B_fold, 2), sub)
    bg = _round_up(bg, sub)
    # Shrink if double-buffered tiles + resident weights would blow the budget.
    while bg > sub and _vmem_bytes(bg, xcols, hid_f, out_f,
                                   x_dtype, c_dtype, o_dtype) > _VMEM_BUDGET:
        bg = max(sub, _round_up(bg // 2, sub))
    return int(bg)


# ---------------------------------------------------------------------------
# Public entry point
# ---------------------------------------------------------------------------
def emotion_separating_encoder(x, w1, b1, w2, b2, *, block_rows=None,
                               compute_dtype=None, fold=None,
                               core_parallel=False):
    """Forward pass. x: [B, input_size] -> [B, output_size] (x.dtype).

    compute_dtype=None (default) keeps the MXU operands in x.dtype (f32 parity
    with the PyTorch reference); pass jnp.bfloat16 for MXU-native operands with
    f32 accumulation.  core_parallel=True uses pltpu.CORE_PARALLEL on the batch
    grid axis (v7x: shards grid steps across both TensorCores).
    """
    B, in_dim = x.shape
    assert w1.shape[0] == in_dim
    hid = w1.shape[1]
    assert w2.shape[0] == hid
    out_dim = w2.shape[1]

    x_dtype = x.dtype
    if compute_dtype is None:
        compute_dtype = x_dtype
    cbytes = jnp.dtype(compute_dtype).itemsize

    # --- lane densification via row folding --------------------------------
    F = _pick_fold(in_dim, hid, out_dim, cbytes) if fold is None else max(1, int(fold))

    # Tiny (<= F-1 row) pad only when B is not a multiple of the fold factor.
    # (This is the only remaining wrapper-side copy; the block-level tail is
    # handled by Pallas OOB masking below, not by padding to the block size.)
    B_eff = _round_up(B, F)
    x_in = x if B_eff == B else jnp.pad(x, ((0, B_eff - B), (0, 0)))
    B_fold = B_eff // F
    xcols, hid_f, out_f = F * in_dim, F * hid, F * out_dim
    xf = x_in.reshape(B_fold, xcols)              # contiguous -> free reshape

    b1v = jnp.asarray(b1, jnp.float32).reshape(1, hid)
    b2v = jnp.asarray(b2, jnp.float32).reshape(1, out_dim)
    if F > 1:
        eye_f = jnp.eye(F, dtype=compute_dtype)
        w1c = jnp.kron(eye_f, w1.astype(compute_dtype))   # block-diag [F*in, F*hid]
        w2c = jnp.kron(eye_f, w2.astype(compute_dtype))   # block-diag [F*hid, F*out]
        b1f = jnp.tile(b1v, (1, F))
        b2f = jnp.tile(b2v, (1, F))
    else:
        w1c, w2c, b1f, b2f = w1.astype(compute_dtype), w2.astype(compute_dtype), b1v, b2v

    # --- tiling -------------------------------------------------------------
    if block_rows is None:
        block_g = _pick_block_g(B_fold, xcols, hid_f, out_f,
                                x_dtype, compute_dtype, x_dtype)
    else:
        min_item = min(jnp.dtype(x_dtype).itemsize, cbytes)
        sub = 8 * (4 // min_item)
        block_g = max(sub, _round_up(pl.cdiv(int(block_rows), F), sub))

    grid = (pl.cdiv(B_fold, block_g),)            # edge block is OOB-masked
    dim_sem = (pltpu.CORE_PARALLEL,) if core_parallel else ("parallel",)

    kernel = functools.partial(_mlp_kernel, compute_dtype=compute_dtype)

    yf = pl.pallas_call(
        kernel,
        out_shape=jax.ShapeDtypeStruct((B_fold, out_f), x_dtype),
        grid_spec=pltpu.PrefetchScalarGridSpec(
            num_scalar_prefetch=0,
            grid=grid,
            in_specs=[
                pl.BlockSpec((block_g, xcols), lambda i: (i, 0)),   # x tile
                pl.BlockSpec((xcols, hid_f), lambda i: (0, 0)),     # W1 (resident)
                pl.BlockSpec((1, hid_f), lambda i: (0, 0)),         # b1
                pl.BlockSpec((hid_f, out_f), lambda i: (0, 0)),     # W2 (resident)
                pl.BlockSpec((1, out_f), lambda i: (0, 0)),         # b2
            ],
            out_specs=pl.BlockSpec((block_g, out_f), lambda i: (i, 0)),
        ),
        compiler_params=pltpu.CompilerParams(
            dimension_semantics=dim_sem,
            vmem_limit_bytes=_VMEM_LIMIT,
        ),
    )(xf, w1c, b1f, w2c, b2f)

    out = yf.reshape(B_eff, out_dim)              # contiguous -> free reshape
    if B_eff != B:
        out = out[:B]
    return out


# ---------------------------------------------------------------------------
# Parameter init matching torch.nn.Linear's U(-1/sqrt(fan_in), 1/sqrt(fan_in))
# ---------------------------------------------------------------------------
def init_params(key, input_size, hidden_size, output_size, dtype=jnp.float32):
    k1, k2, k3, k4 = jax.random.split(key, 4)
    bound1 = 1.0 / (input_size ** 0.5)
    bound2 = 1.0 / (hidden_size ** 0.5)
    w1 = jax.random.uniform(k1, (input_size, hidden_size), dtype, -bound1, bound1)
    b1 = jax.random.uniform(k2, (1, hidden_size), dtype, -bound1, bound1)
    w2 = jax.random.uniform(k3, (hidden_size, output_size), dtype, -bound2, bound2)
    b2 = jax.random.uniform(k4, (1, output_size), dtype, -bound2, bound2)
    return w1, b1, w2, b2


if __name__ == "__main__":
    input_size, hidden_size, output_size = 32, 64, 16

    key = jax.random.PRNGKey(0)
    kx, kp = jax.random.split(key)
    w1, b1, w2, b2 = init_params(kp, input_size, hidden_size, output_size)

    # batch=64 -> exact fold (F=8, no pad); batch=50 -> fold-tail + OOB-masked edge.
    for batch in (64, 50):
        x = jax.random.normal(jax.random.fold_in(kx, batch),
                              (batch, input_size), jnp.float32)

        # Default path: f32 operands -> parity with the PyTorch f32 reference.
        out = jax.block_until_ready(emotion_separating_encoder(x, w1, b1, w2, b2))
        assert out.shape == (batch, output_size)
        ref32 = jnp.maximum(x @ w1 + b1, 0.0) @ w2 + b2
        assert jnp.allclose(out, ref32, atol=1e-4, rtol=1e-4), (
            float(jnp.max(jnp.abs(out - ref32))))

        # Opt-in bf16 MXU path vs. a matching mixed-precision reference.
        outb = jax.block_until_ready(
            emotion_separating_encoder(x, w1, b1, w2, b2,
                                       compute_dtype=jnp.bfloat16))
        xb, w1b, w2b = (a.astype(jnp.bfloat16) for a in (x, w1, w2))
        h_ref = jnp.maximum(
            jnp.dot(xb, w1b, preferred_element_type=jnp.float32) + b1, 0.0)
        ref_bf16 = jnp.dot(h_ref.astype(jnp.bfloat16), w2b,
                           preferred_element_type=jnp.float32) + b2
        assert jnp.allclose(outb, ref_bf16, atol=2e-2, rtol=2e-2), (
            float(jnp.max(jnp.abs(outb - ref_bf16))))

    print("KERNEL_OK")
</pallas_src>

<mosaic_0001>
module attributes {stable_mosaic.version = 11 : i64} {
  func.func @_mlp_kernel(%arg0: i32, %arg1: memref<8x256xf32, #tpu.memory_space<vmem>>, %arg2: memref<256x512xf32, #tpu.memory_space<vmem>>, %arg3: memref<1x512xf32, #tpu.memory_space<vmem>>, %arg4: memref<512x128xf32, #tpu.memory_space<vmem>>, %arg5: memref<1x128xf32, #tpu.memory_space<vmem>>, %arg6: memref<8x128xf32, #tpu.memory_space<vmem>>) attributes {dimension_semantics = [#tpu.dimension_semantics<parallel>], iteration_bounds = array<i64: 1>, scalar_prefetch = 0 : i64, scratch_operands = 0 : i64, tpu.core_type = #tpu.core_type<tc>, window_params = [{transform_indices = @transform_0, window_bounds = array<i64: 8, 256>}, {pipeline_mode = #tpu.pipeline_mode<synchronous>, transform_indices = @transform_1, window_bounds = array<i64: 256, 512>}, {pipeline_mode = #tpu.pipeline_mode<synchronous>, transform_indices = @transform_2, window_bounds = array<i64: 1, 512>}, {pipeline_mode = #tpu.pipeline_mode<synchronous>, transform_indices = @transform_3, window_bounds = array<i64: 512, 128>}, {pipeline_mode = #tpu.pipeline_mode<synchronous>, transform_indices = @transform_4, window_bounds = array<i64: 1, 128>}, {transform_indices = @transform_5, window_bounds = array<i64: 8, 128>}]} {
    %c0 = arith.constant 0 : index
    %c0_0 = arith.constant 0 : index
    %0 = vector.load %arg1[%c0, %c0_0] : memref<8x256xf32, #tpu.memory_space<vmem>>, vector<8x256xf32>
    %c0_1 = arith.constant 0 : index
    %c0_2 = arith.constant 0 : index
    %1 = vector.load %arg2[%c0_1, %c0_2] : memref<256x512xf32, #tpu.memory_space<vmem>>, vector<256x512xf32>
    %cst = arith.constant dense<0.000000e+00> : vector<8x512xf32>
    %2 = tpu.matmul %0, %1, %cst {dimension_numbers = #tpu.dot_dimension_numbers<[1], [0], [0], [1], [0, 0, 1, 1], [], []>} : vector<8x256xf32>, vector<256x512xf32>, vector<8x512xf32> -> vector<8x512xf32>
    %c0_3 = arith.constant 0 : index
    %c0_4 = arith.constant 0 : index
    %3 = vector.load %arg3[%c0_3, %c0_4] : memref<1x512xf32, #tpu.memory_space<vmem>>, vector<1x512xf32>
    %4 = vector.broadcast %3 : vector<1x512xf32> to vector<8x512xf32>
    %5 = arith.addf %2, %4 : vector<8x512xf32>
    %cst_5 = arith.constant 0.000000e+00 : f32
    %6 = vector.broadcast %cst_5 : f32 to vector<8x512xf32>
    %7 = arith.maximumf %5, %6 : vector<8x512xf32>
    %c0_6 = arith.constant 0 : index
    %c0_7 = arith.constant 0 : index
    %8 = vector.load %arg4[%c0_6, %c0_7] : memref<512x128xf32, #tpu.memory_space<vmem>>, vector<512x128xf32>
    %cst_8 = arith.constant dense<0.000000e+00> : vector<8x128xf32>
    %9 = tpu.matmul %7, %8, %cst_8 {dimension_numbers = #tpu.dot_dimension_numbers<[1], [0], [0], [1], [0, 0, 1, 1], [], []>} : vector<8x512xf32>, vector<512x128xf32>, vector<8x128xf32> -> vector<8x128xf32>
    %c0_9 = arith.constant 0 : index
    %c0_10 = arith.constant 0 : index
    %10 = vector.load %arg5[%c0_9, %c0_10] : memref<1x128xf32, #tpu.memory_space<vmem>>, vector<1x128xf32>
    %11 = vector.broadcast %10 : vector<1x128xf32> to vector<8x128xf32>
    %12 = arith.addf %9, %11 : vector<8x128xf32>
    %c0_11 = arith.constant 0 : index
    %c0_12 = arith.constant 0 : index
    %13 = vector.load %arg6[%c0_11, %c0_12] : memref<8x128xf32, #tpu.memory_space<vmem>>, vector<8x128xf32>
    tpu.vector_store %arg6[%c0_11, %c0_12], %12 {strides = array<i32>} : memref<8x128xf32, #tpu.memory_space<vmem>>, vector<8x128xf32>,
    return
  }
  func.func @transform_0(%arg0: i32) -> (i32, i32) {
    %c0_i32 = arith.constant 0 : i32
    %c0_i32_0 = arith.constant 0 : i32
    return %arg0, %c0_i32 : i32, i32
  }
  func.func @transform_1(%arg0: i32) -> (i32, i32) {
    %c0_i32 = arith.constant 0 : i32
    %c0_i32_0 = arith.constant 0 : i32
    %c0_i32_1 = arith.constant 0 : i32
    return %c0_i32, %c0_i32_0 : i32, i32
  }
  func.func @transform_2(%arg0: i32) -> (i32, i32) {
    %c0_i32 = arith.constant 0 : i32
    %c0_i32_0 = arith.constant 0 : i32
    %c0_i32_1 = arith.constant 0 : i32
    return %c0_i32, %c0_i32_0 : i32, i32
  }
  func.func @transform_3(%arg0: i32) -> (i32, i32) {
    %c0_i32 = arith.constant 0 : i32
    %c0_i32_0 = arith.constant 0 : i32
    %c0_i32_1 = arith.constant 0 : i32
    return %c0_i32, %c0_i32_0 : i32, i32
  }
  func.func @transform_4(%arg0: i32) -> (i32, i32) {
    %c0_i32 = arith.constant 0 : i32
    %c0_i32_0 = arith.constant 0 : i32
    %c0_i32_1 = arith.constant 0 : i32
    return %c0_i32, %c0_i32_0 : i32, i32
  }
  func.func @transform_5(%arg0: i32) -> (i32, i32) {
    %c0_i32 = arith.constant 0 : i32
    %c0_i32_0 = arith.constant 0 : i32
    return %arg0, %c0_i32 : i32, i32
  }
}

</mosaic_0001>

<llo_original>
// kernel: tpu_custom_call.1
$region0: #{tpu_custom_call.1}
  #allocation0 [shape = 'u32[]', space=smem, size = 0x4, offset = 0x4, fixed_abs, tag = 'smem constant byte address 0x4 - core index']
  #allocation1 [shape = 'u32[144,128]{1,0:T(1,128)}', space=vmem, size = 0x12000, scoped, tag = 'internal scratch']
  %s0 = inlined_call_operand.hbm [shape: f32[8,256], index: 0, kind: input, shape index: {}]
  %s1 = inlined_call_operand.hbm [shape: f32[256,512], index: 1, kind: input, shape index: {}]
  %s2 = inlined_call_operand.hbm [shape: f32[1,512], index: 2, kind: input, shape index: {}]
  %s3 = inlined_call_operand.hbm [shape: f32[512,128], index: 3, kind: input, shape index: {}]
  %s4 = inlined_call_operand.vmem [shape: f32[1,128], index: 4, kind: input, shape index: {}]
  %s5 = inlined_call_operand.hbm [shape: f32[8,128], index: 5, kind: output, shape index: {}]
  %s6 = sld [smem:[#allocation0]]
  $region46: #{tpu_custom_call.1} parent=0
    _
  %s8 = ssub.s32 1, %s6
  %s9 = scalar_select 0, %s8, %s6
  $region1: #{tpu_custom_call.1} parent=0
    #allocation2 [shape = 'u8[8192]{0}', space=vmem, size = 0x2000, scoped, tag = 'input window, operand 0, single buffered']
    #allocation3 [shape = 's32[1]{0}', space=sflag, size = 0x4, scoped, tag = 'scoped memory for tpu_custom_call.1']
    #allocation4 [shape = 's32[1]{0}', space=sflag, size = 0x4, scoped, tag = 'scoped memory for tpu_custom_call.1']
    #allocation5 [shape = 'u8[524288]{0}', space=vmem, size = 0x80000, scoped, tag = 'input window, operand 1, single buffered']
    #allocation6 [shape = 's32[1]{0}', space=sflag, size = 0x4, scoped, tag = 'scoped memory for tpu_custom_call.1']
    #allocation7 [shape = 'u8[2048]{0}', space=vmem, size = 0x800, scoped, tag = 'input window, operand 2, single buffered']
    #allocation8 [shape = 'u8[262144]{0}', space=vmem, size = 0x40000, scoped, tag = 'input window, operand 3, single buffered']
    #allocation9 [shape = 's32[1]{0}', space=sflag, size = 0x4, scoped, tag = 'scoped memory for tpu_custom_call.1']
    #allocation10 [shape = 'u8[4096]{0}', space=vmem, size = 0x1000, scoped, tag = 'output window, operand 0, single buffered']
    %10 = vsyncpa [#allocation3], 0
    %11 = vsyncpa [#allocation6], 0
    %12 = vsyncpa [#allocation9], 0
    %13 = vsyncpa [#allocation4], 0
    // Predicated region
    $region2: #{tpu_custom_call.1} parent=1 // pred_check
      _
    $region3: #{tpu_custom_call.1} parent=1 // pred_check_branch
      %15 = sbr.rel (0) target = $region5
    $region4: #{tpu_custom_call.1} parent=1 // pred_region
      %s17 = ssub.s32 256, 256
      %18 = vsyncadd [#allocation3], %s17
      %s20 = sshll.u32 [#allocation2], 4
      %s21 = int_to_ptr.vmem [resolvable:$true] %s20
      %23 = dma.hbm_to_vmem [thread:$0]  %s0, 256, %s21, [#allocation3]
    $region5: #{tpu_custom_call.1} parent=1 // pred_fallthru
      _
    // Predicated region
    $region6: #{tpu_custom_call.1} parent=1 // pred_check
      _
    $region7: #{tpu_custom_call.1} parent=1 // pred_check_branch
      %25 = sbr.rel (0) target = $region9
    $region8: #{tpu_custom_call.1} parent=1 // pred_region
      %s27 = ssub.s32 16384, 16384
      %28 = vsyncadd [#allocation6], %s27
      %s29 = sshll.u32 [#allocation5], 4
      %s30 = int_to_ptr.vmem [resolvable:$true] %s29
      %35 = dma.hbm_to_vmem [thread:$0]  %s1, 16384, %s30, [#allocation6], 512, 512, 32
    $region9: #{tpu_custom_call.1} parent=1 // pred_fallthru
      _
    // Predicated region
    $region10: #{tpu_custom_call.1} parent=1 // pred_check
      _
    $region11: #{tpu_custom_call.1} parent=1 // pred_check_branch
      %37 = sbr.rel (0) target = $region13
    $region12: #{tpu_custom_call.1} parent=1 // pred_region
      %s39 = ssub.s32 64, 64
      %40 = vsyncadd [#allocation6], %s39
      %s42 = sshll.u32 [#allocation7], 4
      %s43 = int_to_ptr.vmem [resolvable:$true] %s42
      %45 = dma.hbm_to_vmem [thread:$0]  %s2, 64, %s43, [#allocation6]
    $region13: #{tpu_custom_call.1} parent=1 // pred_fallthru
      _
    // Predicated region
    $region14: #{tpu_custom_call.1} parent=1 // pred_check
      _
    $region15: #{tpu_custom_call.1} parent=1 // pred_check_branch
      %47 = sbr.rel (0) target = $region17
    $region16: #{tpu_custom_call.1} parent=1 // pred_region
      %s49 = ssub.s32 8192, 8192
      %50 = vsyncadd [#allocation9], %s49
      %s51 = sshll.u32 [#allocation8], 4
      %s52 = int_to_ptr.vmem [resolvable:$true] %s51
      %57 = dma.hbm_to_vmem [thread:$0]  %s3, 8192, %s52, [#allocation9], 128, 128, 8
    $region17: #{tpu_custom_call.1} parent=1 // pred_fallthru
      _
    // Predicated region
    $region18: #{tpu_custom_call.1} parent=1 // pred_check
      _
    $region19: #{tpu_custom_call.1} parent=1 // pred_check_branch
      %59 = sbr.rel (0) target = $region21
    $region20: #{tpu_custom_call.1} parent=1 // pred_region
      _
    $region21: #{tpu_custom_call.1} parent=1 // pred_fallthru
      _
    // Predicated region
    $region22: #{tpu_custom_call.1} parent=1 // pred_check
      _
    $region23: #{tpu_custom_call.1} parent=1 // pred_check_branch
      %61 = sbr.rel (0) target = $region25
    $region24: #{tpu_custom_call.1} parent=1 // pred_region
      %62 = dma.done [#allocation3], 256
    $region25: #{tpu_custom_call.1} parent=1 // pred_fallthru
      _
    // Predicated region
    $region26: #{tpu_custom_call.1} parent=1 // pred_check
      _
    $region27: #{tpu_custom_call.1} parent=1 // pred_check_branch
      %64 = sbr.rel (0) target = $region29
    $region28: #{tpu_custom_call.1} parent=1 // pred_region
      %65 = dma.done [#allocation6], 16384
    $region29: #{tpu_custom_call.1} parent=1 // pred_fallthru
      _
    // Predicated region
    $region30: #{tpu_custom_call.1} parent=1 // pred_check
      _
    $region31: #{tpu_custom_call.1} parent=1 // pred_check_branch
      %67 = sbr.rel (0) target = $region33
    $region32: #{tpu_custom_call.1} parent=1 // pred_region
      %68 = dma.done [#allocation6], 64
    $region33: #{tpu_custom_call.1} parent=1 // pred_fallthru
      _
    // Predicated region
    $region34: #{tpu_custom_call.1} parent=1 // pred_check
      _
    $region35: #{tpu_custom_call.1} parent=1 // pred_check_branch
      %70 = sbr.rel (0) target = $region37
    $region36: #{tpu_custom_call.1} parent=1 // pred_region
      %71 = dma.done [#allocation9], 8192
    $region37: #{tpu_custom_call.1} parent=1 // pred_fallthru
      _
    %v72 = vld [vmem:[#allocation2] sm:$0xff]
    %v73 = vld [vmem:[#allocation2 + $0x8] sm:$0xff]
    %v74 = vld [vmem:[#allocation5] sm:$0xff]
    %v75 = vld [vmem:[#allocation5 + $0x8] sm:$0xff]
    %v76 = vld [vmem:[#allocation5 + $0x10] sm:$0xff]
    %v77 = vld [vmem:[#allocation5 + $0x18] sm:$0xff]
    %v78 = vld [vmem:[#allocation5 + $0x20] sm:$0xff]
    %v79 = vld [vmem:[#allocation5 + $0x28] sm:$0xff]
    %v80 = vld [vmem:[#allocation5 + $0x30] sm:$0xff]
    %v81 = vld [vmem:[#allocation5 + $0x38] sm:$0xff]
    %v82 = vld [vmem:[#allocation5 + $0x40] sm:$0xff]
    %v83 = vld [vmem:[#allocation5 + $0x48] sm:$0xff]
    %v84 = vld [vmem:[#allocation5 + $0x50] sm:$0xff]
    %v85 = vld [vmem:[#allocation5 + $0x58] sm:$0xff]
    %v86 = vld [vmem:[#allocation5 + $0x60] sm:$0xff]
    %v87 = vld [vmem:[#allocation5 + $0x68] sm:$0xff]
    %v88 = vld [vmem:[#allocation5 + $0x70] sm:$0xff]
    %v89 = vld [vmem:[#allocation5 + $0x78] sm:$0xff]
    %v90 = vld [vmem:[#allocation5 + $0x80] sm:$0xff]
    %v91 = vld [vmem:[#allocation5 + $0x88] sm:$0xff]
    %v92 = vld [vmem:[#allocation5 + $0x90] sm:$0xff]
    %v93 = vld [vmem:[#allocation5 + $0x98] sm:$0xff]
    %v94 = vld [vmem:[#allocation5 + $0xa0] sm:$0xff]
    %v95 = vld [vmem:[#allocation5 + $0xa8] sm:$0xff]
    %v96 = vld [vmem:[#allocation5 + $0xb0] sm:$0xff]
    %v97 = vld [vmem:[#allocation5 + $0xb8] sm:$0xff]
    %v98 = vld [vmem:[#allocation5 + $0xc0] sm:$0xff]
    %v99 = vld [vmem:[#allocation5 + $0xc8] sm:$0xff]
    %v100 = vld [vmem:[#allocation5 + $0xd0] sm:$0xff]
    %v101 = vld [vmem:[#allocation5 + $0xd8] sm:$0xff]
    %v102 = vld [vmem:[#allocation5 + $0xe0] sm:$0xff]
    %v103 = vld [vmem:[#allocation5 + $0xe8] sm:$0xff]
    %v104 = vld [vmem:[#allocation5 + $0xf0] sm:$0xff]
    %v105 = vld [vmem:[#allocation5 + $0xf8] sm:$0xff]
    %v106 = vld [vmem:[#allocation5 + $0x100] sm:$0xff]
    %v107 = vld [vmem:[#allocation5 + $0x108] sm:$0xff]
    %v108 = vld [vmem:[#allocation5 + $0x110] sm:$0xff]
    %v109 = vld [vmem:[#allocation5 + $0x118] sm:$0xff]
    %v110 = vld [vmem:[#allocation5 + $0x120] sm:$0xff]
    %v111 = vld [vmem:[#allocation5 + $0x128] sm:$0xff]
    %v112 = vld [vmem:[#allocation5 + $0x130] sm:$0xff]
    %v113 = vld [vmem:[#allocation5 + $0x138] sm:$0xff]
    %v114 = vld [vmem:[#allocation5 + $0x140] sm:$0xff]
    %v115 = vld [vmem:[#allocation5 + $0x148] sm:$0xff]
    %v116 = vld [vmem:[#allocation5 + $0x150] sm:$0xff]
    %v117 = vld [vmem:[#allocation5 + $0x158] sm:$0xff]
    %v118 = vld [vmem:[#allocation5 + $0x160] sm:$0xff]
    %v119 = vld [vmem:[#allocation5 + $0x168] sm:$0xff]
    %v120 = vld [vmem:[#allocation5 + $0x170] sm:$0xff]
    %v121 = vld [vmem:[#allocation5 + $0x178] sm:$0xff]
    %v122 = vld [vmem:[#allocation5 + $0x180] sm:$0xff]
    %v123 = vld [vmem:[#allocation5 + $0x188] sm:$0xff]
    %v124 = vld [vmem:[#allocation5 + $0x190] sm:$0xff]
    %v125 = vld [vmem:[#allocation5 + $0x198] sm:$0xff]
    %v126 = vld [vmem:[#allocation5 + $0x1a0] sm:$0xff]
    %v127 = vld [vmem:[#allocation5 + $0x1a8] sm:$0xff]
    %v128 = vld [vmem:[#allocation5 + $0x1b0] sm:$0xff]
    %v129 = vld [vmem:[#allocation5 + $0x1b8] sm:$0xff]
    %v130 = vld [vmem:[#allocation5 + $0x1c0] sm:$0xff]
    %v131 = vld [vmem:[#allocation5 + $0x1c8] sm:$0xff]
    %v132 = vld [vmem:[#allocation5 + $0x1d0] sm:$0xff]
    %v133 = vld [vmem:[#allocation5 + $0x1d8] sm:$0xff]
    %v134 = vld [vmem:[#allocation5 + $0x1e0] sm:$0xff]
    %v135 = vld [vmem:[#allocation5 + $0x1e8] sm:$0xff]
    %v136 = vld [vmem:[#allocation5 + $0x1f0] sm:$0xff]
    %v137 = vld [vmem:[#allocation5 + $0x1f8] sm:$0xff]
    %v138 = vld [vmem:[#allocation5 + $0x200] sm:$0xff]
    %v139 = vld [vmem:[#allocation5 + $0x208] sm:$0xff]
    %v140 = vld [vmem:[#allocation5 + $0x210] sm:$0xff]
    %v141 = vld [vmem:[#allocation5 + $0x218] sm:$0xff]
    %v142 = vld [vmem:[#allocation5 + $0x220] sm:$0xff]
    %v143 = vld [vmem:[#allocation5 + $0x228] sm:$0xff]
    %v144 = vld [vmem:[#allocation5 + $0x230] sm:$0xff]
    %v145 = vld [vmem:[#allocation5 + $0x238] sm:$0xff]
    %v146 = vld [vmem:[#allocation5 + $0x240] sm:$0xff]
    %v147 = vld [vmem:[#allocation5 + $0x248] sm:$0xff]
    %v148 = vld [vmem:[#allocation5 + $0x250] sm:$0xff]
    %v149 = vld [vmem:[#allocation5 + $0x258] sm:$0xff]
    %v150 = vld [vmem:[#allocation5 + $0x260] sm:$0xff]
    %v151 = vld [vmem:[#allocation5 + $0x268] sm:$0xff]
    %v152 = vld [vmem:[#allocation5 + $0x270] sm:$0xff]
    %v153 = vld [vmem:[#allocation5 + $0x278] sm:$0xff]
    %v154 = vld [vmem:[#allocation5 + $0x280] sm:$0xff]
    %v155 = vld [vmem:[#allocation5 + $0x288] sm:$0xff]
    %v156 = vld [vmem:[#allocation5 + $0x290] sm:$0xff]
    %v157 = vld [vmem:[#allocation5 + $0x298] sm:$0xff]
    %v158 = vld [vmem:[#allocation5 + $0x2a0] sm:$0xff]
    %v159 = vld [vmem:[#allocation5 + $0x2a8] sm:$0xff]
    %v160 = vld [vmem:[#allocation5 + $0x2b0] sm:$0xff]
    %v161 = vld [vmem:[#allocation5 + $0x2b8] sm:$0xff]
    %v162 = vld [vmem:[#allocation5 + $0x2c0] sm:$0xff]
    %v163 = vld [vmem:[#allocation5 + $0x2c8] sm:$0xff]
    %v164 = vld [vmem:[#allocation5 + $0x2d0] sm:$0xff]
    %v165 = vld [vmem:[#allocation5 + $0x2d8] sm:$0xff]
    %v166 = vld [vmem:[#allocation5 + $0x2e0] sm:$0xff]
    %v167 = vld [vmem:[#allocation5 + $0x2e8] sm:$0xff]
    %v168 = vld [vmem:[#allocation5 + $0x2f0] sm:$0xff]
    %v169 = vld [vmem:[#allocation5 + $0x2f8] sm:$0xff]
    %v170 = vld [vmem:[#allocation5 + $0x300] sm:$0xff]
    %v171 = vld [vmem:[#allocation5 + $0x308] sm:$0xff]
    %v172 = vld [vmem:[#allocation5 + $0x310] sm:$0xff]
    %v173 = vld [vmem:[#allocation5 + $0x318] sm:$0xff]
    %v174 = vld [vmem:[#allocation5 + $0x320] sm:$0xff]
    %v175 = vld [vmem:[#allocation5 + $0x328] sm:$0xff]
    %v176 = vld [vmem:[#allocation5 + $0x330] sm:$0xff]
    %v177 = vld [vmem:[#allocation5 + $0x338] sm:$0xff]
    %v178 = vld [vmem:[#allocation5 + $0x340] sm:$0xff]
    %v179 = vld [vmem:[#allocation5 + $0x348] sm:$0xff]
    %v180 = vld [vmem:[#allocation5 + $0x350] sm:$0xff]
    %v181 = vld [vmem:[#allocation5 + $0x358] sm:$0xff]
    %v182 = vld [vmem:[#allocation5 + $0x360] sm:$0xff]
    %v183 = vld [vmem:[#allocation5 + $0x368] sm:$0xff]
    %v184 = vld [vmem:[#allocation5 + $0x370] sm:$0xff]
    %v185 = vld [vmem:[#allocation5 + $0x378] sm:$0xff]
    %v186 = vld [vmem:[#allocation5 + $0x380] sm:$0xff]
    %v187 = vld [vmem:[#allocation5 + $0x388] sm:$0xff]
    %v188 = vld [vmem:[#allocation5 + $0x390] sm:$0xff]
    %v189 = vld [vmem:[#allocation5 + $0x398] sm:$0xff]
    %v190 = vld [vmem:[#allocation5 + $0x3a0] sm:$0xff]
    %v191 = vld [vmem:[#allocation5 + $0x3a8] sm:$0xff]
    %v192 = vld [vmem:[#allocation5 + $0x3b0] sm:$0xff]
    %v193 = vld [vmem:[#allocation5 + $0x3b8] sm:$0xff]
    %v194 = vld [vmem:[#allocation5 + $0x3c0] sm:$0xff]
    %v195 = vld [vmem:[#allocation5 + $0x3c8] sm:$0xff]
    %v196 = vld [vmem:[#allocation5 + $0x3d0] sm:$0xff]
    %v197 = vld [vmem:[#allocation5 + $0x3d8] sm:$0xff]
    %v198 = vld [vmem:[#allocation5 + $0x3e0] sm:$0xff]
    %v199 = vld [vmem:[#allocation5 + $0x3e8] sm:$0xff]
    %v200 = vld [vmem:[#allocation5 + $0x3f0] sm:$0xff]
    %v201 = vld [vmem:[#allocation5 + $0x3f8] sm:$0xff]
    %v202 = vld [vmem:[#allocation7] sm:$0xf]
    %v204 = vlaneseq
    %v205 = vshrl.u32 %v204, 7
    %v206 = vsub.s32 0, %v205
    %v207 = vrot.slane %v202, %v206
    %v208 = vlaneseq
    %v209 = vshrl.u32 %v208, 7
    %v210 = vsub.s32 1, %v209
    %v211 = vrot.slane %v202, %v210
    %v212 = vlaneseq
    %v213 = vshrl.u32 %v212, 7
    %v214 = vsub.s32 2, %v213
    %v215 = vrot.slane %v202, %v214
    %v216 = vlaneseq
    %v217 = vshrl.u32 %v216, 7
    %v218 = vsub.s32 3, %v217
    %v219 = vrot.slane %v202, %v218
    %224 = vmatprep.subr.mxu0 %v135
    %225 = vmatpush1.msra.mxu0 %v134
    %226 = vmatprep.subr.mxu0 %v131
    %227 = vmatpush1.msra.mxu0 %v130
    %228 = vmatprep.subr.mxu0 %v127
    %229 = vmatpush1.msra.mxu0 %v126
    %230 = vmatprep.subr.mxu0 %v123
    %231 = vmatpush1.msra.mxu0 %v122
    %232 = vmatprep.subr.mxu0 %v119
    %233 = vmatpush1.msra.mxu0 %v118
    %234 = vmatprep.subr.mxu0 %v115
    %235 = vmatpush1.msra.mxu0 %v114
    %236 = vmatprep.subr.mxu0 %v111
    %237 = vmatpush1.msra.mxu0 %v110
    %238 = vmatprep.subr.mxu0 %v107
    %239 = vmatpush1.msra.mxu0 %v106
    %240 = vmatprep.subr.mxu0 %v103
    %241 = vmatpush1.msra.mxu0 %v102
    %242 = vmatprep.subr.mxu0 %v99
    %243 = vmatpush1.msra.mxu0 %v98
    %244 = vmatprep.subr.mxu0 %v95
    %245 = vmatpush1.msra.mxu0 %v94
    %246 = vmatprep.subr.mxu0 %v91
    %247 = vmatpush1.msra.mxu0 %v90
    %248 = vmatprep.subr.mxu0 %v87
    %249 = vmatpush1.msra.mxu0 %v86
    %250 = vmatprep.subr.mxu0 %v83
    %251 = vmatpush1.msra.mxu0 %v82
    %252 = vmatprep.subr.mxu0 %v79
    %253 = vmatpush1.msra.mxu0 %v78
    %254 = vmatprep.subr.mxu0 %v75
    %255 = vmatpush1.msra.mxu0 %v74
    %256 = vmatprep.subr.mxu0 %v199
    %257 = vmatpush2.msra.mxu0 %v198
    %258 = vmatprep.subr.mxu0 %v195
    %259 = vmatpush2.msra.mxu0 %v194
    %260 = vmatprep.subr.mxu0 %v191
    %261 = vmatpush2.msra.mxu0 %v190
    %262 = vmatprep.subr.mxu0 %v187
    %263 = vmatpush2.msra.mxu0 %v186
    %264 = vmatprep.subr.mxu0 %v183
    %265 = vmatpush2.msra.mxu0 %v182
    %266 = vmatprep.subr.mxu0 %v179
    %267 = vmatpush2.msra.mxu0 %v178
    %268 = vmatprep.subr.mxu0 %v175
    %269 = vmatpush2.msra.mxu0 %v174
    %270 = vmatprep.subr.mxu0 %v171
    %271 = vmatpush2.msra.mxu0 %v170
    %272 = vmatprep.subr.mxu0 %v167
    %273 = vmatpush2.msra.mxu0 %v166
    %274 = vmatprep.subr.mxu0 %v163
    %275 = vmatpush2.msra.mxu0 %v162
    %276 = vmatprep.subr.mxu0 %v159
    %277 = vmatpush2.msra.mxu0 %v158
    %278 = vmatprep.subr.mxu0 %v155
    %279 = vmatpush2.msra.mxu0 %v154
    %280 = vmatprep.subr.mxu0 %v151
    %281 = vmatpush2.msra.mxu0 %v150
    %282 = vmatprep.subr.mxu0 %v147
    %283 = vmatpush2.msra.mxu0 %v146
    %284 = vmatprep.subr.mxu0 %v143
    %285 = vmatpush2.msra.mxu0 %v142
    %286 = vmatprep.subr.mxu0 %v139
    %287 = vmatpush2.msra.mxu0 %v138
    %288 = vmatprep.mubr.f32.mxu0 %v73
    %289 = vmatmul.mubr.f32.gmra.mxu0 %v72
    %v290 = vpop.f32.mrf.mxu0
    %v291 = vadd.f32 %v207, %v290
    %v292 = vpop.f32.mrf.mxu0
    %v293 = vadd.f32 %v211, %v292
    %294 = vdwg.mxu0
    %295 = vmatprep.subr.mxu0 %v137
    %296 = vmatpush1.msra.mxu0 %v136
    %297 = vmatprep.subr.mxu0 %v133
    %298 = vmatpush1.msra.mxu0 %v132
    %299 = vmatprep.subr.mxu0 %v129
    %300 = vmatpush1.msra.mxu0 %v128
    %301 = vmatprep.subr.mxu0 %v125
    %302 = vmatpush1.msra.mxu0 %v124
    %303 = vmatprep.subr.mxu0 %v121
    %304 = vmatpush1.msra.mxu0 %v120
    %305 = vmatprep.subr.mxu0 %v117
    %306 = vmatpush1.msra.mxu0 %v116
    %307 = vmatprep.subr.mxu0 %v113
    %308 = vmatpush1.msra.mxu0 %v112
    %309 = vmatprep.subr.mxu0 %v109
    %310 = vmatpush1.msra.mxu0 %v108
    %311 = vmatprep.subr.mxu0 %v105
    %312 = vmatpush1.msra.mxu0 %v104
    %313 = vmatprep.subr.mxu0 %v101
    %314 = vmatpush1.msra.mxu0 %v100
    %315 = vmatprep.subr.mxu0 %v97
    %316 = vmatpush1.msra.mxu0 %v96
    %317 = vmatprep.subr.mxu0 %v93
    %318 = vmatpush1.msra.mxu0 %v92
    %319 = vmatprep.subr.mxu0 %v89
    %320 = vmatpush1.msra.mxu0 %v88
    %321 = vmatprep.subr.mxu0 %v85
    %322 = vmatpush1.msra.mxu0 %v84
    %323 = vmatprep.subr.mxu0 %v81
    %324 = vmatpush1.msra.mxu0 %v80
    %325 = vmatprep.subr.mxu0 %v77
    %326 = vmatpush1.msra.mxu0 %v76
    %327 = vmatprep.subr.mxu0 %v201
    %328 = vmatpush2.msra.mxu0 %v200
    %329 = vmatprep.subr.mxu0 %v197
    %330 = vmatpush2.msra.mxu0 %v196
    %331 = vmatprep.subr.mxu0 %v193
    %332 = vmatpush2.msra.mxu0 %v192
    %333 = vmatprep.subr.mxu0 %v189
    %334 = vmatpush2.msra.mxu0 %v188
    %335 = vmatprep.subr.mxu0 %v185
    %336 = vmatpush2.msra.mxu0 %v184
    %337 = vmatprep.subr.mxu0 %v181
    %338 = vmatpush2.msra.mxu0 %v180
    %339 = vmatprep.subr.mxu0 %v177
    %340 = vmatpush2.msra.mxu0 %v176
    %341 = vmatprep.subr.mxu0 %v173
    %342 = vmatpush2.msra.mxu0 %v172
    %343 = vmatprep.subr.mxu0 %v169
    %344 = vmatpush2.msra.mxu0 %v168
    %345 = vmatprep.subr.mxu0 %v165
    %346 = vmatpush2.msra.mxu0 %v164
    %347 = vmatprep.subr.mxu0 %v161
    %348 = vmatpush2.msra.mxu0 %v160
    %349 = vmatprep.subr.mxu0 %v157
    %350 = vmatpush2.msra.mxu0 %v156
    %351 = vmatprep.subr.mxu0 %v153
    %352 = vmatpush2.msra.mxu0 %v152
    %353 = vmatprep.subr.mxu0 %v149
    %354 = vmatpush2.msra.mxu0 %v148
    %355 = vmatprep.subr.mxu0 %v145
    %356 = vmatpush2.msra.mxu0 %v144
    %357 = vmatprep.subr.mxu0 %v141
    %358 = vmatpush2.msra.mxu0 %v140
    %359 = vmatprep.mubr.f32.mxu0 %v73
    %360 = vmatmul.mubr.f32.gmra.mxu0 %v72
    %v361 = vpop.f32.mrf.mxu0
    %v362 = vadd.f32 %v215, %v361
    %v363 = vpop.f32.mrf.mxu0
    %v364 = vadd.f32 %v219, %v363
    %365 = vdwg.mxu0
    %v366 = vmax.f32 %v291, 0.0
    %v367 = vmax.f32 %v293, 0.0
    %v368 = vmax.f32 %v362, 0.0
    %v369 = vmax.f32 %v364, 0.0
    %v370 = vld [vmem:[#allocation8] sm:$0xff]
    %v371 = vld [vmem:[#allocation8 + $0x8] sm:$0xff]
    %v372 = vld [vmem:[#allocation8 + $0x10] sm:$0xff]
    %v373 = vld [vmem:[#allocation8 + $0x18] sm:$0xff]
    %v374 = vld [vmem:[#allocation8 + $0x20] sm:$0xff]
    %v375 = vld [vmem:[#allocation8 + $0x28] sm:$0xff]
    %v376 = vld [vmem:[#allocation8 + $0x30] sm:$0xff]
    %v377 = vld [vmem:[#allocation8 + $0x38] sm:$0xff]
    %v378 = vld [vmem:[#allocation8 + $0x40] sm:$0xff]
    %v379 = vld [vmem:[#allocation8 + $0x48] sm:$0xff]
    %v380 = vld [vmem:[#allocation8 + $0x50] sm:$0xff]
    %v381 = vld [vmem:[#allocation8 + $0x58] sm:$0xff]
    %v382 = vld [vmem:[#allocation8 + $0x60] sm:$0xff]
    %v383 = vld [vmem:[#allocation8 + $0x68] sm:$0xff]
    %v384 = vld [vmem:[#allocation8 + $0x70] sm:$0xff]
    %v385 = vld [vmem:[#allocation8 + $0x78] sm:$0xff]
    %v386 = vld [vmem:[#allocation8 + $0x80] sm:$0xff]
    %v387 = vld [vmem:[#allocation8 + $0x88] sm:$0xff]
    %v388 = vld [vmem:[#allocation8 + $0x90] sm:$0xff]
    %v389 = vld [vmem:[#allocation8 + $0x98] sm:$0xff]
    %v390 = vld [vmem:[#allocation8 + $0xa0] sm:$0xff]
    %v391 = vld [vmem:[#allocation8 + $0xa8] sm:$0xff]
    %v392 = vld [vmem:[#allocation8 + $0xb0] sm:$0xff]
    %v393 = vld [vmem:[#allocation8 + $0xb8] sm:$0xff]
    %v394 = vld [vmem:[#allocation8 + $0xc0] sm:$0xff]
    %v395 = vld [vmem:[#allocation8 + $0xc8] sm:$0xff]
    %v396 = vld [vmem:[#allocation8 + $0xd0] sm:$0xff]
    %v397 = vld [vmem:[#allocation8 + $0xd8] sm:$0xff]
    %v398 = vld [vmem:[#allocation8 + $0xe0] sm:$0xff]
    %v399 = vld [vmem:[#allocation8 + $0xe8] sm:$0xff]
    %v400 = vld [vmem:[#allocation8 + $0xf0] sm:$0xff]
    %v401 = vld [vmem:[#allocation8 + $0xf8] sm:$0xff]
    %v402 = vld [vmem:[#allocation8 + $0x100] sm:$0xff]
    %v403 = vld [vmem:[#allocation8 + $0x108] sm:$0xff]
    %v404 = vld [vmem:[#allocation8 + $0x110] sm:$0xff]
    %v405 = vld [vmem:[#allocation8 + $0x118] sm:$0xff]
    %v406 = vld [vmem:[#allocation8 + $0x120] sm:$0xff]
    %v407 = vld [vmem:[#allocation8 + $0x128] sm:$0xff]
    %v408 = vld [vmem:[#allocation8 + $0x130] sm:$0xff]
    %v409 = vld [vmem:[#allocation8 + $0x138] sm:$0xff]
    %v410 = vld [vmem:[#allocation8 + $0x140] sm:$0xff]
    %v411 = vld [vmem:[#allocation8 + $0x148] sm:$0xff]
    %v412 = vld [vmem:[#allocation8 + $0x150] sm:$0xff]
    %v413 = vld [vmem:[#allocation8 + $0x158] sm:$0xff]
    %v414 = vld [vmem:[#allocation8 + $0x160] sm:$0xff]
    %v415 = vld [vmem:[#allocation8 + $0x168] sm:$0xff]
    %v416 = vld [vmem:[#allocation8 + $0x170] sm:$0xff]
    %v417 = vld [vmem:[#allocation8 + $0x178] sm:$0xff]
    %v418 = vld [vmem:[#allocation8 + $0x180] sm:$0xff]
    %v419 = vld [vmem:[#allocation8 + $0x188] sm:$0xff]
    %v420 = vld [vmem:[#allocation8 + $0x190] sm:$0xff]
    %v421 = vld [vmem:[#allocation8 + $0x198] sm:$0xff]
    %v422 = vld [vmem:[#allocation8 + $0x1a0] sm:$0xff]
    %v423 = vld [vmem:[#allocation8 + $0x1a8] sm:$0xff]
    %v424 = vld [vmem:[#allocation8 + $0x1b0] sm:$0xff]
    %v425 = vld [vmem:[#allocation8 + $0x1b8] sm:$0xff]
    %v426 = vld [vmem:[#allocation8 + $0x1c0] sm:$0xff]
    %v427 = vld [vmem:[#allocation8 + $0x1c8] sm:$0xff]
    %v428 = vld [vmem:[#allocation8 + $0x1d0] sm:$0xff]
    %v429 = vld [vmem:[#allocation8 + $0x1d8] sm:$0xff]
    %v430 = vld [vmem:[#allocation8 + $0x1e0] sm:$0xff]
    %v431 = vld [vmem:[#allocation8 + $0x1e8] sm:$0xff]
    %v432 = vld [vmem:[#allocation8 + $0x1f0] sm:$0xff]
    %v433 = vld [vmem:[#allocation8 + $0x1f8] sm:$0xff]
    %v434 = vld [vmem:[%s4] sm:$0x1]
    %v436 = vlaneseq
    %v437 = vshrl.u32 %v436, 7
    %v438 = vsub.s32 0, %v437
    %v439 = vrot.slane %v434, %v438
    %441 = vmatprep.subr.mxu0 0.0
    %442 = vmatpush1.msra.mxu0 %v385
    %443 = vmatprep.subr.mxu0 0.0
    %444 = vmatpush1.msra.mxu0 %v384
    %445 = vmatprep.subr.mxu0 0.0
    %446 = vmatpush1.msra.mxu0 %v383
    %447 = vmatprep.subr.mxu0 0.0
    %448 = vmatpush1.msra.mxu0 %v382
    %449 = vmatprep.subr.mxu0 0.0
    %450 = vmatpush1.msra.mxu0 %v381
    %451 = vmatprep.subr.mxu0 0.0
    %452 = vmatpush1.msra.mxu0 %v380
    %453 = vmatprep.subr.mxu0 0.0
    %454 = vmatpush1.msra.mxu0 %v379
    %455 = vmatprep.subr.mxu0 0.0
    %456 = vmatpush1.msra.mxu0 %v378
    %457 = vmatprep.subr.mxu0 0.0
    %458 = vmatpush1.msra.mxu0 %v377
    %459 = vmatprep.subr.mxu0 0.0
    %460 = vmatpush1.msra.mxu0 %v376
    %461 = vmatprep.subr.mxu0 0.0
    %462 = vmatpush1.msra.mxu0 %v375
    %463 = vmatprep.subr.mxu0 0.0
    %464 = vmatpush1.msra.mxu0 %v374
    %465 = vmatprep.subr.mxu0 0.0
    %466 = vmatpush1.msra.mxu0 %v373
    %467 = vmatprep.subr.mxu0 0.0
    %468 = vmatpush1.msra.mxu0 %v372
    %469 = vmatprep.subr.mxu0 0.0
    %470 = vmatpush1.msra.mxu0 %v371
    %471 = vmatprep.subr.mxu0 0.0
    %472 = vmatpush1.msra.mxu0 %v370
    %473 = vmatprep.subr.mxu0 0.0
    %474 = vmatpush2.msra.mxu0 %v401
    %475 = vmatprep.subr.mxu0 0.0
    %476 = vmatpush2.msra.mxu0 %v400
    %477 = vmatprep.subr.mxu0 0.0
    %478 = vmatpush2.msra.mxu0 %v399
    %479 = vmatprep.subr.mxu0 0.0
    %480 = vmatpush2.msra.mxu0 %v398
    %481 = vmatprep.subr.mxu0 0.0
    %482 = vmatpush2.msra.mxu0 %v397
    %483 = vmatprep.subr.mxu0 0.0
    %484 = vmatpush2.msra.mxu0 %v396
    %485 = vmatprep.subr.mxu0 0.0
    %486 = vmatpush2.msra.mxu0 %v395
    %487 = vmatprep.subr.mxu0 0.0
    %488 = vmatpush2.msra.mxu0 %v394
    %489 = vmatprep.subr.mxu0 0.0
    %490 = vmatpush2.msra.mxu0 %v393
    %491 = vmatprep.subr.mxu0 0.0
    %492 = vmatpush2.msra.mxu0 %v392
    %493 = vmatprep.subr.mxu0 0.0
    %494 = vmatpush2.msra.mxu0 %v391
    %495 = vmatprep.subr.mxu0 0.0
    %496 = vmatpush2.msra.mxu0 %v390
    %497 = vmatprep.subr.mxu0 0.0
    %498 = vmatpush2.msra.mxu0 %v389
    %499 = vmatprep.subr.mxu0 0.0
    %500 = vmatpush2.msra.mxu0 %v388
    %501 = vmatprep.subr.mxu0 0.0
    %502 = vmatpush2.msra.mxu0 %v387
    %503 = vmatprep.subr.mxu0 0.0
    %504 = vmatpush2.msra.mxu0 %v386
    %505 = vmatprep.mubr.f32.mxu0 %v367
    %506 = vmatmul.mubr.f32.gmra.mxu0 %v366
    %v507 = vpop.f32.mrf.mxu0
    %v508 = vadd.f32 %v439, %v507
    %v509 = vpop.f32.mrf.mxu0
    %510 = vdwg.mxu0
    %511 = vmatprep.subr.mxu0 0.0
    %512 = vmatpush1.msra.mxu0 %v417
    %513 = vmatprep.subr.mxu0 0.0
    %514 = vmatpush1.msra.mxu0 %v416
    %515 = vmatprep.subr.mxu0 0.0
    %516 = vmatpush1.msra.mxu0 %v415
    %517 = vmatprep.subr.mxu0 0.0
    %518 = vmatpush1.msra.mxu0 %v414
    %519 = vmatprep.subr.mxu0 0.0
    %520 = vmatpush1.msra.mxu0 %v413
    %521 = vmatprep.subr.mxu0 0.0
    %522 = vmatpush1.msra.mxu0 %v412
    %523 = vmatprep.subr.mxu0 0.0
    %524 = vmatpush1.msra.mxu0 %v411
    %525 = vmatprep.subr.mxu0 0.0
    %526 = vmatpush1.msra.mxu0 %v410
    %527 = vmatprep.subr.mxu0 0.0
    %528 = vmatpush1.msra.mxu0 %v409
    %529 = vmatprep.subr.mxu0 0.0
    %530 = vmatpush1.msra.mxu0 %v408
    %531 = vmatprep.subr.mxu0 0.0
    %532 = vmatpush1.msra.mxu0 %v407
    %533 = vmatprep.subr.mxu0 0.0
    %534 = vmatpush1.msra.mxu0 %v406
    %535 = vmatprep.subr.mxu0 0.0
    %536 = vmatpush1.msra.mxu0 %v405
    %537 = vmatprep.subr.mxu0 0.0
    %538 = vmatpush1.msra.mxu0 %v404
    %539 = vmatprep.subr.mxu0 0.0
    %540 = vmatpush1.msra.mxu0 %v403
    %541 = vmatprep.subr.mxu0 0.0
    %542 = vmatpush1.msra.mxu0 %v402
    %543 = vmatprep.subr.mxu0 0.0
    %544 = vmatpush2.msra.mxu0 %v433
    %545 = vmatprep.subr.mxu0 0.0
    %546 = vmatpush2.msra.mxu0 %v432
    %547 = vmatprep.subr.mxu0 0.0
    %548 = vmatpush2.msra.mxu0 %v431
    %549 = vmatprep.subr.mxu0 0.0
    %550 = vmatpush2.msra.mxu0 %v430
    %551 = vmatprep.subr.mxu0 0.0
    %552 = vmatpush2.msra.mxu0 %v429
    %553 = vmatprep.subr.mxu0 0.0
    %554 = vmatpush2.msra.mxu0 %v428
    %555 = vmatprep.subr.mxu0 0.0
    %556 = vmatpush2.msra.mxu0 %v427
    %557 = vmatprep.subr.mxu0 0.0
    %558 = vmatpush2.msra.mxu0 %v426
    %559 = vmatprep.subr.mxu0 0.0
    %560 = vmatpush2.msra.mxu0 %v425
    %561 = vmatprep.subr.mxu0 0.0
    %562 = vmatpush2.msra.mxu0 %v424
    %563 = vmatprep.subr.mxu0 0.0
    %564 = vmatpush2.msra.mxu0 %v423
    %565 = vmatprep.subr.mxu0 0.0
    %566 = vmatpush2.msra.mxu0 %v422
    %567 = vmatprep.subr.mxu0 0.0
    %568 = vmatpush2.msra.mxu0 %v421
    %569 = vmatprep.subr.mxu0 0.0
    %570 = vmatpush2.msra.mxu0 %v420
    %571 = vmatprep.subr.mxu0 0.0
    %572 = vmatpush2.msra.mxu0 %v419
    %573 = vmatprep.subr.mxu0 0.0
    %574 = vmatpush2.msra.mxu0 %v418
    %575 = vmatprep.mubr.f32.mxu0 %v369
    %576 = vmatmul.mubr.f32.gmra.mxu0 %v368
    %v577 = vpop.f32.mrf.mxu0
    %v578 = vadd.f32 %v508, %v577
    %v579 = vpop.f32.mrf.mxu0
    %580 = vdwg.mxu0
    %581 = vst [vmem:[#allocation10] sm:$0xff] %v578
    // Predicated region
    $region38: #{tpu_custom_call.1} parent=1 // pred_check
      _
    $region39: #{tpu_custom_call.1} parent=1 // pred_check_branch
      %583 = sbr.rel (0) target = $region41
    $region40: #{tpu_custom_call.1} parent=1 // pred_region
      %s585 = ssub.s32 128, 128
      %586 = vsyncadd [#allocation4], %s585
      %s588 = sshll.u32 [#allocation10], 4
      %s589 = int_to_ptr.vmem [resolvable:$true] %s588
      %591 = dma.vmem_to_hbm [thread:$0]  %s589, 128, %s5, [#allocation4]
    $region41: #{tpu_custom_call.1} parent=1 // pred_fallthru
      _
    // Predicated region
    $region42: #{tpu_custom_call.1} parent=1 // pred_check
      _
    $region43: #{tpu_custom_call.1} parent=1 // pred_check_branch
      %593 = sbr.rel (0) target = $region45
    $region44: #{tpu_custom_call.1} parent=1 // pred_region
      %594 = dma.done [#allocation4], 128
    $region45: #{tpu_custom_call.1} parent=1 // pred_fallthru
      _
    %595 = vsyncpa [#allocation3], 1
    %596 = vsyncpa [#allocation6], 1
    %597 = vsyncpa [#allocation9], 1
    %598 = vsyncpa [#allocation4], 1

</llo_original>
